<compile_context>
chip_gen: v7x
topology: tpu7x:2x2x1
jax: 0.10.0
libtpu: 0.0.40
codegen_flags: <defaults>
</compile_context>

<pallas_src>
import functools
import math

import jax
import jax.numpy as jnp
from jax import lax
from jax.experimental import pallas as pl
from jax.experimental.pallas import tpu as pltpu

N_EMBD = 32
HEAD_SIZE = 16
CONTEXT_LENGTH = 256  # upper bound on T
DROPOUT = 0.3  # TODO(synk): dropout is identity in eval mode; not applied in the kernel.


def _head_attention_kernel(x_ref, wqkv_ref, bias_ref, o_ref, *, head_size,
                           approx_recip):
    """Fused causal single-head attention over a block of Bb batch elements.

    x_ref   : (Bb, T, C)  VMEM, f32 or bf16 (MXU input dtype)
    wqkv_ref: (C, 3H)     VMEM, same dtype as x; columns ordered [Wk | Wq | Wv]
    bias_ref: (T, T)      VMEM f32 additive causal mask (0 on/below diag, -inf above)
    o_ref   : (Bb, H, T)  VMEM f32 — written transposed so the lane dim is T
                          (lane-dense when T is a multiple of 128).
    """
    Bb, T, C = x_ref.shape
    H = head_size
    mxu_dtype = x_ref.dtype

    # Fused QKV projection: one (Bb*T, C) @ (C, 3H) MXU matmul, f32 accumulation.
    x2d = x_ref[...].reshape(Bb * T, C)
    qkv = jnp.dot(x2d, wqkv_ref[...],
                  preferred_element_type=jnp.float32)            # (Bb*T, 3H) f32
    qkv = qkv.reshape(Bb, T, 3 * H)
    k = qkv[:, :, 0 * H:1 * H]
    q = qkv[:, :, 1 * H:2 * H] * (H ** -0.5)   # fold 1/sqrt(H) into q (exact: H=16)
    v = qkv[:, :, 2 * H:3 * H]

    # Scores: contract the head dim directly (no explicit k^T materialization).
    s = jnp.einsum("bqh,bkh->bqk", q.astype(mxu_dtype), k.astype(mxu_dtype),
                   preferred_element_type=jnp.float32)           # (Bb, T, T) f32
    s = s + bias_ref[...]                                        # causal mask (additive)

    # Numerically stable softmax in f32.
    m = jnp.max(s, axis=-1, keepdims=True)
    p = jnp.exp(s - m)
    denom = jnp.sum(p, axis=-1, keepdims=True)
    w = p * pl.reciprocal(denom, approx=approx_recip)            # (Bb, T, T)

    # Output produced directly as (Bb, H, T) on the MXU (lane-dense store).
    out_t = jnp.einsum("bkh,bqk->bhq", v.astype(mxu_dtype), w.astype(mxu_dtype),
                       preferred_element_type=jnp.float32)       # (Bb, H, T)
    o_ref[...] = out_t.astype(o_ref.dtype)


def _pick_block_b(B, max_block=8):
    """Largest divisor of B <= max_block that keeps the grid >= 2 steps
    (so both TensorCores get work on v7x); falls back to 1 for B == 1."""
    best = 1
    for d in range(1, min(B, max_block) + 1):
        if B % d == 0 and (B // d >= 2 or B == 1):
            best = d
    return best


def head_forward(x, wk, wq, wv, *, block_b=None, compute_dtype=jnp.bfloat16):
    """x: (B, T, C) f32; wk/wq/wv: (head_size, C) f32 (PyTorch nn.Linear weights).

    compute_dtype controls the MXU input dtype (bf16 by default; accumulation
    and softmax are always f32). Returns (B, T, head_size) f32.
    """
    B, T, C = x.shape
    H = wk.shape[0]
    assert T <= CONTEXT_LENGTH

    if block_b is None:
        block_b = _pick_block_b(B)
    assert B % block_b == 0
    grid_b = B // block_b

    # Fuse the three projection weights into one (C, 3H) matrix, ordered [k|q|v].
    wqkv = jnp.concatenate([wk.T, wq.T, wv.T], axis=1)

    # Precompute the additive causal mask once; its BlockSpec index is
    # grid-invariant so it is DMA'd once and stays resident in VMEM.
    causal_bias = jnp.where(
        jnp.tril(jnp.ones((T, T), dtype=bool)), 0.0, -jnp.inf).astype(jnp.float32)

    mxu_dtype = jnp.dtype(compute_dtype)
    x_in = x.astype(mxu_dtype)
    w_in = wqkv.astype(mxu_dtype)
    approx_recip = bool(mxu_dtype == jnp.dtype(jnp.bfloat16))

    kernel = functools.partial(
        _head_attention_kernel, head_size=H, approx_recip=approx_recip)

    out_t = pl.pallas_call(
        kernel,
        out_shape=jax.ShapeDtypeStruct((B, H, T), jnp.float32),
        grid_spec=pltpu.PrefetchScalarGridSpec(
            num_scalar_prefetch=0,
            grid=(grid_b,),
            in_specs=[
                pl.BlockSpec((block_b, T, C), lambda b: (b, 0, 0)),
                pl.BlockSpec((C, 3 * H), lambda b: (0, 0)),
                pl.BlockSpec((T, T), lambda b: (0, 0)),
            ],
            out_specs=pl.BlockSpec((block_b, H, T), lambda b: (b, 0, 0)),
        ),
        compiler_params=pltpu.CompilerParams(
            dimension_semantics=("parallel",)),
    )(x_in, w_in, causal_bias)

    # Kernel stores (B, H, T); transpose back to (B, T, H) with a cheap XLA op.
    return jnp.swapaxes(out_t, -2, -1)


def head_forward_ref(x, wk, wq, wv):
    """Pure-JAX reference mirroring the PyTorch forward (eval mode)."""
    k = x @ wk.T
    q = x @ wq.T
    v = x @ wv.T
    H = k.shape[-1]
    w = (q @ jnp.swapaxes(k, -2, -1)) * (H ** -0.5)
    T = x.shape[1]
    mask = jnp.tril(jnp.ones((T, T), dtype=bool))
    w = jnp.where(mask, w, -jnp.inf)
    w = jax.nn.softmax(w, axis=-1)
    return w @ v


if __name__ == "__main__":
    key = jax.random.PRNGKey(0)
    kx, kk, kq, kv = jax.random.split(key, 4)

    B, T, C, H = 2, 8, N_EMBD, HEAD_SIZE

    x = jax.random.normal(kx, (B, T, C), dtype=jnp.float32)

    # Deterministic "nn.Linear(N_EMBD, head_size, bias=False)" style init:
    # U(-1/sqrt(in_features), 1/sqrt(in_features)), weight shape (out, in).
    bound = 1.0 / math.sqrt(C)
    wk = jax.random.uniform(kk, (H, C), jnp.float32, -bound, bound)
    wq = jax.random.uniform(kq, (H, C), jnp.float32, -bound, bound)
    wv = jax.random.uniform(kv, (H, C), jnp.float32, -bound, bound)

    ref = head_forward_ref(x, wk, wq, wv)

    # f32 MXU path: must match the PyTorch-equivalent reference tightly.
    out_f32 = jax.block_until_ready(
        head_forward(x, wk, wq, wv, compute_dtype=jnp.float32))
    assert out_f32.shape == (B, T, H)
    assert jnp.allclose(out_f32, ref, atol=1e-5, rtol=1e-5), "f32 kernel mismatch"

    # bf16-input MXU path (default, per perf guidance): f32 accumulation and
    # softmax, so only a mild precision loss vs the f32 reference.
    out_bf16 = jax.block_until_ready(head_forward(x, wk, wq, wv))
    assert out_bf16.shape == (B, T, H)
    assert jnp.allclose(out_bf16, ref, atol=5e-2, rtol=5e-2), "bf16 kernel mismatch"

    print("KERNEL_OK")
</pallas_src>

<mosaic_0001>
module attributes {stable_mosaic.version = 11 : i64} {
  func.func @_head_attention_kernel(%arg0: i32, %arg1: memref<1x8x32xf32, #tpu.memory_space<vmem>>, %arg2: memref<32x48xf32, #tpu.memory_space<vmem>>, %arg3: memref<8x8xf32, #tpu.memory_space<vmem>>, %arg4: memref<1x16x8xf32, #tpu.memory_space<vmem>>) attributes {dimension_semantics = [#tpu.dimension_semantics<parallel>], iteration_bounds = array<i64: 2>, scalar_prefetch = 0 : i64, scratch_operands = 0 : i64, tpu.core_type = #tpu.core_type<tc>, window_params = [{transform_indices = @transform_0, window_bounds = array<i64: 1, 8, 32>}, {pipeline_mode = #tpu.pipeline_mode<synchronous>, transform_indices = @transform_1, window_bounds = array<i64: 32, 48>}, {pipeline_mode = #tpu.pipeline_mode<synchronous>, transform_indices = @transform_2, window_bounds = array<i64: 8, 8>}, {transform_indices = @transform_3, window_bounds = array<i64: 1, 16, 8>}]} {
    %c0 = arith.constant 0 : index
    %c0_0 = arith.constant 0 : index
    %c0_1 = arith.constant 0 : index
    %0 = vector.load %arg1[%c0, %c0_0, %c0_1] : memref<1x8x32xf32, #tpu.memory_space<vmem>>, vector<1x8x32xf32>
    %1 = vector.shape_cast %0 : vector<1x8x32xf32> to vector<8x32xf32>
    %c0_2 = arith.constant 0 : index
    %c0_3 = arith.constant 0 : index
    %2 = vector.load %arg2[%c0_2, %c0_3] : memref<32x48xf32, #tpu.memory_space<vmem>>, vector<32x48xf32>
    %cst = arith.constant dense<0.000000e+00> : vector<8x48xf32>
    %3 = tpu.matmul %1, %2, %cst {dimension_numbers = #tpu.dot_dimension_numbers<[1], [0], [0], [1], [0, 0, 1, 1], [], []>} : vector<8x32xf32>, vector<32x48xf32>, vector<8x48xf32> -> vector<8x48xf32>
    %4 = vector.shape_cast %3 : vector<8x48xf32> to vector<1x8x48xf32>
    %5 = vector.extract_strided_slice %4 {offsets = [0, 0, 0], sizes = [1, 8, 16], strides = [1, 1, 1]} : vector<1x8x48xf32> to vector<1x8x16xf32>
    %6 = vector.extract_strided_slice %4 {offsets = [0, 0, 16], sizes = [1, 8, 16], strides = [1, 1, 1]} : vector<1x8x48xf32> to vector<1x8x16xf32>
    %cst_4 = arith.constant 2.500000e-01 : f32
    %7 = vector.broadcast %cst_4 : f32 to vector<1x8x16xf32>
    %8 = arith.mulf %6, %7 : vector<1x8x16xf32>
    %9 = vector.extract_strided_slice %4 {offsets = [0, 0, 32], sizes = [1, 8, 16], strides = [1, 1, 1]} : vector<1x8x48xf32> to vector<1x8x16xf32>
    "tpu.trace_start"() <{level = 10 : i32, message = "bqh,bkh->bqk"}> : () -> ()
    %cst_5 = arith.constant dense<0.000000e+00> : vector<1x8x8xf32>
    %10 = tpu.matmul %8, %5, %cst_5 {dimension_numbers = #tpu.dot_dimension_numbers<[2], [2], [1], [1], [0, 0, 0, 1, 1, 1], [0], [0]>} : vector<1x8x16xf32>, vector<1x8x16xf32>, vector<1x8x8xf32> -> vector<1x8x8xf32>
    "tpu.trace_stop"() : () -> ()
    %c0_6 = arith.constant 0 : index
    %c0_7 = arith.constant 0 : index
    %11 = vector.load %arg3[%c0_6, %c0_7] : memref<8x8xf32, #tpu.memory_space<vmem>>, vector<8x8xf32>
    %12 = vector.shape_cast %11 : vector<8x8xf32> to vector<1x8x8xf32>
    %13 = arith.addf %10, %12 : vector<1x8x8xf32>
    %cst_8 = arith.constant dense<0xFF800000> : vector<1x8xf32>
    %14 = vector.multi_reduction <maximumf>, %13, %cst_8 [2] : vector<1x8x8xf32> to vector<1x8xf32>
    %15 = vector.shape_cast %14 : vector<1x8xf32> to vector<1x8x1xf32>
    %16 = vector.broadcast %15 : vector<1x8x1xf32> to vector<1x8x8xf32>
    %17 = arith.subf %13, %16 : vector<1x8x8xf32>
    %18 = math.exp %17 : vector<1x8x8xf32>
    %cst_9 = arith.constant dense<0.000000e+00> : vector<1x8xf32>
    %19 = vector.multi_reduction <add>, %18, %cst_9 [2] : vector<1x8x8xf32> to vector<1x8xf32>
    %20 = vector.shape_cast %19 : vector<1x8xf32> to vector<1x8x1xf32>
    %21 = tpu.reciprocal %20 : vector<1x8x1xf32> -> vector<1x8x1xf32>
    %22 = vector.broadcast %21 : vector<1x8x1xf32> to vector<1x8x8xf32>
    %23 = arith.mulf %18, %22 : vector<1x8x8xf32>
    "tpu.trace_start"() <{level = 10 : i32, message = "bkh,bqk->bhq"}> : () -> ()
    %cst_10 = arith.constant dense<0.000000e+00> : vector<1x16x8xf32>
    %24 = tpu.matmul %9, %23, %cst_10 {dimension_numbers = #tpu.dot_dimension_numbers<[1], [2], [2], [1], [0, 0, 0, 2, 1, 1], [0], [0]>} : vector<1x8x16xf32>, vector<1x8x8xf32>, vector<1x16x8xf32> -> vector<1x16x8xf32>
    "tpu.trace_stop"() : () -> ()
    %c0_11 = arith.constant 0 : index
    %c0_12 = arith.constant 0 : index
    %c0_13 = arith.constant 0 : index
    %25 = vector.load %arg4[%c0_11, %c0_12, %c0_13] : memref<1x16x8xf32, #tpu.memory_space<vmem>>, vector<1x16x8xf32>
    tpu.vector_store %arg4[%c0_11, %c0_12, %c0_13], %24 {strides = array<i32>} : memref<1x16x8xf32, #tpu.memory_space<vmem>>, vector<1x16x8xf32>,
    return
  }
  func.func @transform_0(%arg0: i32) -> (i32, i32, i32) {
    %c0_i32 = arith.constant 0 : i32
    %c0_i32_0 = arith.constant 0 : i32
    %c0_i32_1 = arith.constant 0 : i32
    return %arg0, %c0_i32, %c0_i32_0 : i32, i32, i32
  }
  func.func @transform_1(%arg0: i32) -> (i32, i32) {
    %c0_i32 = arith.constant 0 : i32
    %c0_i32_0 = arith.constant 0 : i32
    %c0_i32_1 = arith.constant 0 : i32
    return %c0_i32, %c0_i32_0 : i32, i32
  }
  func.func @transform_2(%arg0: i32) -> (i32, i32) {
    %c0_i32 = arith.constant 0 : i32
    %c0_i32_0 = arith.constant 0 : i32
    %c0_i32_1 = arith.constant 0 : i32
    return %c0_i32, %c0_i32_0 : i32, i32
  }
  func.func @transform_3(%arg0: i32) -> (i32, i32, i32) {
    %c0_i32 = arith.constant 0 : i32
    %c0_i32_0 = arith.constant 0 : i32
    %c0_i32_1 = arith.constant 0 : i32
    return %arg0, %c0_i32, %c0_i32_0 : i32, i32, i32
  }
}

</mosaic_0001>

<llo_original>
// kernel: tpu_custom_call.1
$region0: #{tpu_custom_call.1}
  #allocation0 [shape = 'u32[]', space=smem, size = 0x4, offset = 0x4, fixed_abs, tag = 'smem constant byte address 0x4 - core index']
  #allocation1 [shape = 'u32[144,128]{1,0:T(1,128)}', space=vmem, size = 0x12000, scoped, tag = 'internal scratch']
  %s0 = inlined_call_operand.hbm [shape: f32[2,8,32], index: 0, kind: input, shape index: {}]
  %s1 = inlined_call_operand.hbm [shape: f32[32,48], index: 1, kind: input, shape index: {}]
  %s2 = inlined_call_operand.hbm [shape: f32[8,8], index: 2, kind: input, shape index: {}]
  %s3 = inlined_call_operand.vmem [shape: f32[2,16,8], index: 3, kind: output, shape index: {}]
  %s4 = sld [smem:[#allocation0]]
  $region57: #{tpu_custom_call.1} parent=0
    _
  %s6 = ssub.s32 1, %s4
  %s7 = scalar_select 0, %s6, %s4
  $region1: #{tpu_custom_call.1} parent=0
    #allocation2 [shape = 'u8[8192]{0}', space=vmem, size = 0x2000, scoped, tag = 'input window, operand 0']
    #allocation3 [shape = 's32[2]{0}', space=sflag, size = 0x8, scoped, tag = 'scoped memory for tpu_custom_call.1']
    #allocation4 [shape = 'u8[16384]{0}', space=vmem, size = 0x4000, scoped, tag = 'input window, operand 1, single buffered']
    #allocation5 [shape = 's32[1]{0}', space=sflag, size = 0x4, scoped, tag = 'scoped memory for tpu_custom_call.1']
    #allocation6 [shape = 'u8[4096]{0}', space=vmem, size = 0x1000, scoped, tag = 'input window, operand 2, single buffered']
    %8 = vsyncpa [#allocation3], 0
    %s9 = scalar_lea.sflag [#allocation3], 1
    %10 = vsyncpa %s9, 0
    %11 = vsyncpa [#allocation5], 0
    loop: start=0, step=1, limit=4
    $region2: #{tpu_custom_call.1} parent=1 // loop_pre_header
      _
    $region3: #{tpu_custom_call.1} parent=1 // loop_header
      %s13 = sphi 0, %s17
      %p14 = scmp.ge.s32.totalorder %s13, 4
      %s23 = sphi 0, %s25
      %s26 = sphi 0, %s23
      %s27 = sphi 0, %s26
      %s43 = sphi 0, %s27
      %s47 = sphi 0, %s47
      %s49 = sphi 0, %s47
      %s50 = sphi 0, %s49
      %s64 = sphi 0, %s50
      %s68 = sphi 0, %s68
      %s70 = sphi 0, %s68
      %s71 = sphi 0, %s70
      %s85 = sphi 0, %s71
      %s91 = sphi 0, %s93
      %s94 = sphi 0, %s91
      %s95 = sphi 0, %s94
      %s111 = sphi 0, %s95
    $region4: #{tpu_custom_call.1} parent=1 // loop_header_branch
      %16 = sbr.rel (%p14) target = $region8
    $region5: #{tpu_custom_call.1} parent=1 // loop_body
      %s18 = ssub.s32 %s13, 1
      %s19 = ssub.s32 %s13, 2
      %s20 = sadd.s32 %s13, 1
      %s21 = ssub.s32 %s13, %s20
      %p22 = scmp.eq.s32.totalorder %s21, 0
      %s24 = sadd.s32 %s23, 1
      %s25 = scalar_select %p22, %s23, %s24
      %p28 = pneg %p22
      %p29 = scmp.eq.s32.totalorder %s13, 1
      %p30 = por %p28, %p29
      %p31 = scmp.ne.s32.totalorder %s23, %s26
      %p32 = scmp.eq.s32.totalorder %s13, 0
      %p33 = por %p31, %p32
      %p34 = scmp.ne.s32.totalorder %s23, %s26
      %p35 = scmp.eq.s32.totalorder %s18, 1
      %p36 = por %p34, %p35
      %p37 = scmp.ne.s32.totalorder %s26, %s27
      %p38 = scmp.eq.s32.totalorder %s18, 0
      %p39 = por %p37, %p38
      %p40 = scmp.ne.s32.totalorder %s26, %s27
      %p41 = scmp.eq.s32.totalorder %s19, 1
      %p42 = por %p40, %p41
      %p44 = scmp.ne.s32.totalorder %s27, %s43
      %p45 = scmp.eq.s32.totalorder %s19, 0
      %p46 = por %p44, %p45
      %s48 = sadd.s32 %s47, 1
      %p51 = scmp.eq.s32.totalorder %s13, 1
      %p52 = scmp.ne.s32.totalorder %s47, %s49
      %p53 = scmp.eq.s32.totalorder %s13, 0
      %p54 = por %p52, %p53
      %p55 = scmp.ne.s32.totalorder %s47, %s49
      %p56 = scmp.eq.s32.totalorder %s18, 1
      %p57 = por %p55, %p56
      %p58 = scmp.ne.s32.totalorder %s49, %s50
      %p59 = scmp.eq.s32.totalorder %s18, 0
      %p60 = por %p58, %p59
      %p61 = scmp.ne.s32.totalorder %s49, %s50
      %p62 = scmp.eq.s32.totalorder %s19, 1
      %p63 = por %p61, %p62
      %p65 = scmp.ne.s32.totalorder %s50, %s64
      %p66 = scmp.eq.s32.totalorder %s19, 0
      %p67 = por %p65, %p66
      %s69 = sadd.s32 %s68, 1
      %p72 = scmp.eq.s32.totalorder %s13, 1
      %p73 = scmp.ne.s32.totalorder %s68, %s70
      %p74 = scmp.eq.s32.totalorder %s13, 0
      %p75 = por %p73, %p74
      %p76 = scmp.ne.s32.totalorder %s68, %s70
      %p77 = scmp.eq.s32.totalorder %s18, 1
      %p78 = por %p76, %p77
      %p79 = scmp.ne.s32.totalorder %s70, %s71
      %p80 = scmp.eq.s32.totalorder %s18, 0
      %p81 = por %p79, %p80
      %p82 = scmp.ne.s32.totalorder %s70, %s71
      %p83 = scmp.eq.s32.totalorder %s19, 1
      %p84 = por %p82, %p83
      %p86 = scmp.ne.s32.totalorder %s71, %s85
      %p87 = scmp.eq.s32.totalorder %s19, 0
      %p88 = por %p86, %p87
      %s89 = ssub.s32 %s13, %s20
      %p90 = scmp.eq.s32.totalorder %s89, 0
      %s92 = sadd.s32 %s91, 1
      %s93 = scalar_select %p90, %s91, %s92
      %p96 = pneg %p90
      %p97 = scmp.eq.s32.totalorder %s13, 1
      %p98 = por %p96, %p97
      %p99 = scmp.ne.s32.totalorder %s91, %s94
      %p100 = scmp.eq.s32.totalorder %s13, 0
      %p101 = por %p99, %p100
      %p102 = scmp.ne.s32.totalorder %s91, %s94
      %p103 = scmp.eq.s32.totalorder %s18, 1
      %p104 = por %p102, %p103
      %p105 = scmp.ne.s32.totalorder %s94, %s95
      %p106 = scmp.eq.s32.totalorder %s18, 0
      %p107 = por %p105, %p106
      %p108 = scmp.ne.s32.totalorder %s94, %s95
      %p109 = scmp.eq.s32.totalorder %s19, 1
      %p110 = por %p108, %p109
      %p112 = scmp.ne.s32.totalorder %s95, %s111
      %p113 = scmp.eq.s32.totalorder %s19, 0
      %p114 = por %p112, %p113
      %p115 = scmp.le.s32.totalorder 1, %s13
      %p116 = scmp.lt.s32.totalorder %s13, 3
      %p117 = pnand %p115, %p116
      %p118 = pneg %p117
      // Predicated region
      $region9: #{tpu_custom_call.1} parent=5 // pred_check
        _
      $region10: #{tpu_custom_call.1} parent=5 // pred_check_branch
        %120 = sbr.rel (%p117) target = $region12
      $region11: #{tpu_custom_call.1} parent=5 // pred_region
        %s121 = ssub.s32 %s13, 1
        // Predicated region
        $region13: #{tpu_custom_call.1} parent=11 // pred_check
          %p122 = pneg %p60
        $region14: #{tpu_custom_call.1} parent=11 // pred_check_branch
          %124 = sbr.rel (%p122) target = $region16
        $region15: #{tpu_custom_call.1} parent=11 // pred_region
          %s126 = ssub.s32 512, 512
          %127 = vsyncadd [#allocation5], %s126
          %s128 = sshll.u32 [#allocation4], 4
          %s129 = int_to_ptr.vmem [resolvable:$true] %s128
          %134 = dma.hbm_to_vmem [thread:$0]  %s1, 512, %s129, [#allocation5], 128, 128, 8
        $region16: #{tpu_custom_call.1} parent=11 // pred_fallthru
          _
        // Predicated region
        $region17: #{tpu_custom_call.1} parent=11 // pred_check
          %p135 = pneg %p81
        $region18: #{tpu_custom_call.1} parent=11 // pred_check_branch
          %137 = sbr.rel (%p135) target = $region20
        $region19: #{tpu_custom_call.1} parent=11 // pred_region
          %s139 = ssub.s32 128, 128
          %140 = vsyncadd [#allocation5], %s139
          %s142 = sshll.u32 [#allocation6], 4
          %s143 = int_to_ptr.vmem [resolvable:$true] %s142
          %145 = dma.hbm_to_vmem [thread:$0]  %s2, 128, %s143, [#allocation5]
        $region20: #{tpu_custom_call.1} parent=11 // pred_fallthru
          _
      $region12: #{tpu_custom_call.1} parent=5 // pred_fallthru
        _
      %p146 = scmp.lt.s32.totalorder %s13, 2
      // Predicated region
      $region21: #{tpu_custom_call.1} parent=5 // pred_check
        %p147 = pneg %p146
      $region22: #{tpu_custom_call.1} parent=5 // pred_check_branch
        %149 = sbr.rel (%p147) target = $region24
      $region23: #{tpu_custom_call.1} parent=5 // pred_region
        // Predicated region
        $region25: #{tpu_custom_call.1} parent=23 // pred_check
          %p150 = pneg %p33
        $region26: #{tpu_custom_call.1} parent=23 // pred_check_branch
          %152 = sbr.rel (%p150) target = $region28
        $region27: #{tpu_custom_call.1} parent=23 // pred_region
          %s153 = sand.u32 %s23, 1
          %s154 = scalar_lea.sflag [#allocation3], %s153
          %s155 = sand.u32 %s23, 1
          %s156 = smul.addr %s155, 8
          %s157 = scalar_lea.vmem [#allocation2], %s156
          %s159 = ssub.s32 128, 128
          %160 = vsyncadd %s154, %s159
          %s161 = smul.addr %s13, 128
          %s162 = scalar_lea.hbm %s0, %s161
          %s164 = sshll.u32 %s157, 4
          %s165 = int_to_ptr.vmem [resolvable:$true] %s164
          %167 = dma.hbm_to_vmem [thread:$0]  %s162, 128, %s165, %s154
        $region28: #{tpu_custom_call.1} parent=23 // pred_fallthru
          _
      $region24: #{tpu_custom_call.1} parent=5 // pred_fallthru
        _
      %p168 = scmp.le.s32.totalorder 1, %s13
      %p169 = scmp.lt.s32.totalorder %s13, 3
      %p170 = pnand %p168, %p169
      %p171 = pneg %p170
      // Predicated region
      $region29: #{tpu_custom_call.1} parent=5 // pred_check
        _
      $region30: #{tpu_custom_call.1} parent=5 // pred_check_branch
        %173 = sbr.rel (%p170) target = $region32
      $region31: #{tpu_custom_call.1} parent=5 // pred_region
        %s174 = ssub.s32 %s13, 1
        %s175 = sand.u32 %s26, 1
        %s176 = scalar_lea.sflag [#allocation3], %s175
        %s177 = sand.u32 %s26, 1
        %s178 = smul.addr %s177, 8
        %s179 = scalar_lea.vmem [#allocation2], %s178
        // Predicated region
        $region33: #{tpu_custom_call.1} parent=31 // pred_check
          %p180 = pneg %p39
        $region34: #{tpu_custom_call.1} parent=31 // pred_check_branch
          %182 = sbr.rel (%p180) target = $region36
        $region35: #{tpu_custom_call.1} parent=31 // pred_region
          %183 = dma.done %s176, 128
        $region36: #{tpu_custom_call.1} parent=31 // pred_fallthru
          _
        // Predicated region
        $region37: #{tpu_custom_call.1} parent=31 // pred_check
          %p184 = pneg %p60
        $region38: #{tpu_custom_call.1} parent=31 // pred_check_branch
          %186 = sbr.rel (%p184) target = $region40
        $region39: #{tpu_custom_call.1} parent=31 // pred_region
          %187 = dma.done [#allocation5], 512
        $region40: #{tpu_custom_call.1} parent=31 // pred_fallthru
          _
        // Predicated region
        $region41: #{tpu_custom_call.1} parent=31 // pred_check
          %p188 = pneg %p81
        $region42: #{tpu_custom_call.1} parent=31 // pred_check_branch
          %190 = sbr.rel (%p188) target = $region44
        $region43: #{tpu_custom_call.1} parent=31 // pred_region
          %191 = dma.done [#allocation5], 128
        $region44: #{tpu_custom_call.1} parent=31 // pred_fallthru
          _
        %s192 = sand.u32 %s26, 1
        %s193 = scalar_lea.sflag [#allocation3], %s192
        %s194 = sand.u32 %s26, 1
        %s195 = smul.addr %s194, 8
        %s196 = scalar_lea.vmem [#allocation2], %s195
        %p197 = pneg %p39
        %p198 = pneg %p36
        %p199 = pneg %p60
        %p200 = pneg %p57
        %p201 = pneg %p81
        %p202 = pneg %p78
        %p203 = pneg %p107
        %p204 = pneg %p104
        %p205 = scmp.lt.s32.totalorder %s18, 1
        %s206 = scalar_select %p205, %s18, 1
        %s207 = smul.addr %s206, 2
        %s208 = smul.addr %s207, 8
        %s209 = scalar_lea.vmem %s3, %s208
        %p210 = scmp.lt.s32.totalorder %s18, 1
        %s211 = scalar_select %p210, %s18, 1
        %s212 = smul.addr %s211, 2
        %s213 = smul.addr %s212, 8
        %s214 = scalar_lea.vmem %s3, %s213
        %v215 = vld [vmem:[%s179] sm:$0xff]
        %v216 = vld [vmem:[#allocation4] sm:$0xff]
        %v217 = vld [vmem:[#allocation4 + $0x8] sm:$0xff]
        %v218 = vld [vmem:[#allocation4 + $0x10] sm:$0xff]
        %v219 = vld [vmem:[#allocation4 + $0x18] sm:$0xff]
        %vm220 = vcmask 261120
        %v222 = vsel %vm220, %v215, 0
        %224 = vmatprep.subr.mxu0 0.0
        %225 = vmatpush1.msra.mxu0 %v216
        %226 = vmatprep.subr.mxu0 0.0
        %227 = vmatpush1.msra.mxu0 %v217
        %228 = vmatprep.subr.mxu0 0.0
        %229 = vmatpush1.msra.mxu0 %v218
        %230 = vmatprep.subr.mxu0 0.0
        %231 = vmatpush1.msra.mxu0 %v219
        %232 = vmatprep.subr.mxu0 0.0
        %233 = vmatpush1.msra.mxu0 0.0
        %234 = vmatprep.subr.mxu0 0.0
        %235 = vmatpush1.msra.mxu0 0.0
        %236 = vmatprep.subr.mxu0 0.0
        %237 = vmatpush1.msra.mxu0 0.0
        %238 = vmatprep.subr.mxu0 0.0
        %239 = vmatpush1.msra.mxu0 0.0
        %240 = vmatprep.subr.mxu0 0.0
        %241 = vmatpush1.msra.mxu0 0.0
        %242 = vmatprep.subr.mxu0 0.0
        %243 = vmatpush1.msra.mxu0 0.0
        %244 = vmatprep.subr.mxu0 0.0
        %245 = vmatpush1.msra.mxu0 0.0
        %246 = vmatprep.subr.mxu0 0.0
        %247 = vmatpush1.msra.mxu0 0.0
        %248 = vmatprep.subr.mxu0 0.0
        %249 = vmatpush1.msra.mxu0 0.0
        %250 = vmatprep.subr.mxu0 0.0
        %251 = vmatpush1.msra.mxu0 0.0
        %252 = vmatprep.subr.mxu0 0.0
        %253 = vmatpush1.msra.mxu0 0.0
        %254 = vmatprep.subr.mxu0 0.0
        %255 = vmatpush1.msra.mxu0 0.0
        %256 = vmatprep.subr.mxu0 0.0
        %257 = vmatpush1.msra.mxu0 0.0
        %258 = vmatprep.subr.mxu0 0.0
        %259 = vmatpush1.msra.mxu0 0.0
        %260 = vmatprep.subr.mxu0 0.0
        %261 = vmatpush1.msra.mxu0 0.0
        %262 = vmatprep.subr.mxu0 0.0
        %263 = vmatpush1.msra.mxu0 0.0
        %264 = vmatprep.subr.mxu0 0.0
        %265 = vmatpush1.msra.mxu0 0.0
        %266 = vmatprep.subr.mxu0 0.0
        %267 = vmatpush1.msra.mxu0 0.0
        %268 = vmatprep.subr.mxu0 0.0
        %269 = vmatpush1.msra.mxu0 0.0
        %270 = vmatprep.subr.mxu0 0.0
        %271 = vmatpush1.msra.mxu0 0.0
        %272 = vmatprep.subr.mxu0 0.0
        %273 = vmatpush1.msra.mxu0 0.0
        %274 = vmatprep.subr.mxu0 0.0
        %275 = vmatpush1.msra.mxu0 0.0
        %276 = vmatprep.subr.mxu0 0.0
        %277 = vmatpush1.msra.mxu0 0.0
        %278 = vmatprep.subr.mxu0 0.0
        %279 = vmatpush1.msra.mxu0 0.0
        %280 = vmatprep.subr.mxu0 0.0
        %281 = vmatpush1.msra.mxu0 0.0
        %282 = vmatprep.subr.mxu0 0.0
        %283 = vmatpush1.msra.mxu0 0.0
        %284 = vmatprep.subr.mxu0 0.0
        %285 = vmatpush1.msra.mxu0 0.0
        %286 = vmatprep.subr.mxu0 0.0
        %287 = vmatpush1.msra.mxu0 0.0
        %288 = vmatprep.mubr.f32.mxu0 0.0
        %289 = vmatmul.mubr.f32.gmra.mrb[0].mxu0 %v222
        %v290 = vpop.f32.mrb[0].mxu0
        %v291 = vadd.f32 0.0, %v290
        %v292 = vpop.f32.mrb[0].mxu0
        %293 = vdwg.mxu0
        %v294 = vmul.f32 %v291, 0.25
        %v295 = vld [vmem:[#allocation6] sm:$0xff]
        %297 = vrot.lane.b32.xlu0 %v294, 112
        %v298 = vpop.permute.xlu0 %297
        %vm299 = vcmask 130048
        %v300 = vsel %vm299, %v298, 0
        %v303 = vsel %vm299, %v291, 0
        %305 = vmatprep.subr.mxu0 0.0
        %306 = vmatpush1.xpose.msra.mxu0 %v303
        %307 = vmatprep.subr.mxu0 0.0
        %308 = vmatpush1.xpose.msra.mxu0 0.0
        %309 = vmatprep.subr.mxu0 0.0
        %310 = vmatpush1.xpose.msra.mxu0 0.0
        %311 = vmatprep.subr.mxu0 0.0
        %312 = vmatpush1.xpose.msra.mxu0 0.0
        %313 = vmatprep.subr.mxu0 0.0
        %314 = vmatpush1.xpose.msra.mxu0 0.0
        %315 = vmatprep.subr.mxu0 0.0
        %316 = vmatpush1.xpose.msra.mxu0 0.0
        %317 = vmatprep.subr.mxu0 0.0
        %318 = vmatpush1.xpose.msra.mxu0 0.0
        %319 = vmatprep.subr.mxu0 0.0
        %320 = vmatpush1.xpose.msra.mxu0 0.0
        %321 = vmatprep.subr.mxu0 0.0
        %322 = vmatpush1.xpose.msra.mxu0 0.0
        %323 = vmatprep.subr.mxu0 0.0
        %324 = vmatpush1.xpose.msra.mxu0 0.0
        %325 = vmatprep.subr.mxu0 0.0
        %326 = vmatpush1.xpose.msra.mxu0 0.0
        %327 = vmatprep.subr.mxu0 0.0
        %328 = vmatpush1.xpose.msra.mxu0 0.0
        %329 = vmatprep.subr.mxu0 0.0
        %330 = vmatpush1.xpose.msra.mxu0 0.0
        %331 = vmatprep.subr.mxu0 0.0
        %332 = vmatpush1.xpose.msra.mxu0 0.0
        %333 = vmatprep.subr.mxu0 0.0
        %334 = vmatpush1.xpose.msra.mxu0 0.0
        %335 = vmatprep.subr.mxu0 0.0
        %336 = vmatpush1.xpose.msra.mxu0 0.0
        %337 = vmatprep.subr.mxu0 0.0
        %338 = vmatpush1.xpose.msra.mxu0 0.0
        %339 = vmatprep.subr.mxu0 0.0
        %340 = vmatpush1.xpose.msra.mxu0 0.0
        %341 = vmatprep.subr.mxu0 0.0
        %342 = vmatpush1.xpose.msra.mxu0 0.0
        %343 = vmatprep.subr.mxu0 0.0
        %344 = vmatpush1.xpose.msra.mxu0 0.0
        %345 = vmatprep.subr.mxu0 0.0
        %346 = vmatpush1.xpose.msra.mxu0 0.0
        %347 = vmatprep.subr.mxu0 0.0
        %348 = vmatpush1.xpose.msra.mxu0 0.0
        %349 = vmatprep.subr.mxu0 0.0
        %350 = vmatpush1.xpose.msra.mxu0 0.0
        %351 = vmatprep.subr.mxu0 0.0
        %352 = vmatpush1.xpose.msra.mxu0 0.0
        %353 = vmatprep.subr.mxu0 0.0
        %354 = vmatpush1.xpose.msra.mxu0 0.0
        %355 = vmatprep.subr.mxu0 0.0
        %356 = vmatpush1.xpose.msra.mxu0 0.0
        %357 = vmatprep.subr.mxu0 0.0
        %358 = vmatpush1.xpose.msra.mxu0 0.0
        %359 = vmatprep.subr.mxu0 0.0
        %360 = vmatpush1.xpose.msra.mxu0 0.0
        %361 = vmatprep.subr.mxu0 0.0
        %362 = vmatpush1.xpose.msra.mxu0 0.0
        %363 = vmatprep.subr.mxu0 0.0
        %364 = vmatpush1.xpose.msra.mxu0 0.0
        %365 = vmatprep.subr.mxu0 0.0
        %366 = vmatpush1.xpose.msra.mxu0 0.0
        %367 = vmatprep.subr.mxu0 0.0
        %368 = vmatpush1.xpose.msra.mxu0 0.0
        %369 = vmatprep.mubr.f32.mxu0 0.0
        %370 = vmatmul.mubr.f32.gmra.mrb[0].mxu0 %v300
        %v371 = vpop.f32.mrb[0].mxu0
        %v372 = vadd.f32 %v295, %v371
        %v373 = vpop.f32.mrb[0].mxu0
        %374 = vdwg.mxu0
        %vm375 = vcmask 64512
        %v376 = vsel %vm375, %v372, -inf
        %377 = vmax.xlane.f32.xlu0 %v376
        %v378 = vpop.xlane.xlu0 %377
        %v379 = vsub.f32 %v372, %v378
        %v380 = vmul.f32 %v379, 1.442695
        %v381 = vpow.pop %v380
        %v382 = vsel %vm375, %v381, 0.0
        %383 = vadd.xlane.f32.xlu0 %v382
        %v384 = vpop.xlane.xlu0 %383
        %v385 = vrcp.pop %v384
        %v386 = vmul.f32 %v381, %v385
        %387 = vrot.lane.b32.xlu0 %v291, 96
        %v388 = vpop.permute.xlu0 %387
        %390 = vxpose.xlu0.b32.start [1/16] %v388, 128
        %391 = vxpose.xlu0.b32.cont [2/16] 0.0, 128
        %392 = vxpose.xlu0.b32.cont [3/16] 0.0, 128
        %393 = vxpose.xlu0.b32.cont [4/16] 0.0, 128
        %394 = vxpose.xlu0.b32.cont [5/16] 0.0, 128
        %395 = vxpose.xlu0.b32.cont [6/16] 0.0, 128
        %396 = vxpose.xlu0.b32.cont [7/16] 0.0, 128
        %397 = vxpose.xlu0.b32.cont [8/16] 0.0, 128
        %398 = vxpose.xlu0.b32.cont [9/16] 0.0, 128
        %399 = vxpose.xlu0.b32.cont [10/16] 0.0, 128
        %400 = vxpose.xlu0.b32.cont [11/16] 0.0, 128
        %401 = vxpose.xlu0.b32.cont [12/16] 0.0, 128
        %402 = vxpose.xlu0.b32.cont [13/16] 0.0, 128
        %403 = vxpose.xlu0.b32.cont [14/16] 0.0, 128
        %404 = vxpose.xlu0.b32.cont [15/16] 0.0, 128
        %405 = vxpose.xlu0.b32.end [16/16] 0.0, 128
        %v406 = vpop.trf.xlu0
        %v407 = vpop.trf.xlu0
        %v408 = vpop.trf.xlu0
        %v409 = vpop.trf.xlu0
        %v410 = vpop.trf.xlu0
        %v411 = vpop.trf.xlu0
        %v412 = vpop.trf.xlu0
        %v413 = vpop.trf.xlu0
        %v414 = vpop.trf.xlu0
        %v415 = vpop.trf.xlu0
        %v416 = vpop.trf.xlu0
        %v417 = vpop.trf.xlu0
        %v418 = vpop.trf.xlu0
        %v419 = vpop.trf.xlu0
        %v420 = vpop.trf.xlu0
        %v421 = vpop.trf.xlu0
        %v423 = vsel %vm375, %v406, 0
        %v426 = vsel %vm375, %v407, 0
        %v429 = vsel %vm375, %v386, 0
        %431 = vmatprep.subr.mxu0 0.0
        %432 = vmatpush1.xpose.msra.mxu0 %v429
        %433 = vmatprep.subr.mxu0 0.0
        %434 = vmatpush1.xpose.msra.mxu0 0.0
        %435 = vmatprep.subr.mxu0 0.0
        %436 = vmatpush1.xpose.msra.mxu0 0.0
        %437 = vmatprep.subr.mxu0 0.0
        %438 = vmatpush1.xpose.msra.mxu0 0.0
        %439 = vmatprep.subr.mxu0 0.0
        %440 = vmatpush1.xpose.msra.mxu0 0.0
        %441 = vmatprep.subr.mxu0 0.0
        %442 = vmatpush1.xpose.msra.mxu0 0.0
        %443 = vmatprep.subr.mxu0 0.0
        %444 = vmatpush1.xpose.msra.mxu0 0.0
        %445 = vmatprep.subr.mxu0 0.0
        %446 = vmatpush1.xpose.msra.mxu0 0.0
        %447 = vmatprep.subr.mxu0 0.0
        %448 = vmatpush1.xpose.msra.mxu0 0.0
        %449 = vmatprep.subr.mxu0 0.0
        %450 = vmatpush1.xpose.msra.mxu0 0.0
        %451 = vmatprep.subr.mxu0 0.0
        %452 = vmatpush1.xpose.msra.mxu0 0.0
        %453 = vmatprep.subr.mxu0 0.0
        %454 = vmatpush1.xpose.msra.mxu0 0.0
        %455 = vmatprep.subr.mxu0 0.0
        %456 = vmatpush1.xpose.msra.mxu0 0.0
        %457 = vmatprep.subr.mxu0 0.0
        %458 = vmatpush1.xpose.msra.mxu0 0.0
        %459 = vmatprep.subr.mxu0 0.0
        %460 = vmatpush1.xpose.msra.mxu0 0.0
        %461 = vmatprep.subr.mxu0 0.0
        %462 = vmatpush1.xpose.msra.mxu0 0.0
        %463 = vmatprep.subr.mxu0 0.0
        %464 = vmatpush1.xpose.msra.mxu0 0.0
        %465 = vmatprep.subr.mxu0 0.0
        %466 = vmatpush1.xpose.msra.mxu0 0.0
        %467 = vmatprep.subr.mxu0 0.0
        %468 = vmatpush1.xpose.msra.mxu0 0.0
        %469 = vmatprep.subr.mxu0 0.0
        %470 = vmatpush1.xpose.msra.mxu0 0.0
        %471 = vmatprep.subr.mxu0 0.0
        %472 = vmatpush1.xpose.msra.mxu0 0.0
        %473 = vmatprep.subr.mxu0 0.0
        %474 = vmatpush1.xpose.msra.mxu0 0.0
        %475 = vmatprep.subr.mxu0 0.0
        %476 = vmatpush1.xpose.msra.mxu0 0.0
        %477 = vmatprep.subr.mxu0 0.0
        %478 = vmatpush1.xpose.msra.mxu0 0.0
        %479 = vmatprep.subr.mxu0 0.0
        %480 = vmatpush1.xpose.msra.mxu0 0.0
        %481 = vmatprep.subr.mxu0 0.0
        %482 = vmatpush1.xpose.msra.mxu0 0.0
        %483 = vmatprep.subr.mxu0 0.0
        %484 = vmatpush1.xpose.msra.mxu0 0.0
        %485 = vmatprep.subr.mxu0 0.0
        %486 = vmatpush1.xpose.msra.mxu0 0.0
        %487 = vmatprep.subr.mxu0 0.0
        %488 = vmatpush1.xpose.msra.mxu0 0.0
        %489 = vmatprep.subr.mxu0 0.0
        %490 = vmatpush1.xpose.msra.mxu0 0.0
        %491 = vmatprep.subr.mxu0 0.0
        %492 = vmatpush1.xpose.msra.mxu0 0.0
        %493 = vmatprep.subr.mxu0 0.0
        %494 = vmatpush1.xpose.msra.mxu0 0.0
        %495 = vmatprep.mubr.f32.mxu0 0.0
        %496 = vmatmul.mubr.f32.gmra.mrb[0].mxu0 %v423
        %v497 = vpop.f32.mrb[0].mxu0
        %v498 = vadd.f32 0.0, %v497
        %v499 = vpop.f32.mrb[0].mxu0
        %500 = vmatprep.mubr.f32.mxu0 0.0
        %501 = vmatmul.mubr.f32.gmra.mrb[0].mxu0 %v426
        %v502 = vpop.f32.mrb[0].mxu0
        %v503 = vadd.f32 0.0, %v502
        %v504 = vpop.f32.mrb[0].mxu0
        %505 = vdwg.mxu0
        %506 = vst.msk [vmem:[%s214] sm:$0xff] %vm375, %v498
        %507 = vst.msk [vmem:[%s214 + $0x8] sm:$0xff] %vm375, %v503
        %p508 = scmp.lt.s32.totalorder %s18, 1
        %s509 = scalar_select %p508, %s18, 1
        %s510 = smul.addr %s509, 2
        %s511 = smul.addr %s510, 8
        %s512 = scalar_lea.vmem %s3, %s511
        // Predicated region
        $region45: #{tpu_custom_call.1} parent=31 // pred_check
          %p513 = pneg %p104
        $region46: #{tpu_custom_call.1} parent=31 // pred_check_branch
          %515 = sbr.rel (%p513) target = $region48
        $region47: #{tpu_custom_call.1} parent=31 // pred_region
          _
        $region48: #{tpu_custom_call.1} parent=31 // pred_fallthru
          _
      $region32: #{tpu_custom_call.1} parent=5 // pred_fallthru
        _
      %p516 = scmp.le.s32.totalorder 2, %s13
      // Predicated region
      $region49: #{tpu_custom_call.1} parent=5 // pred_check
        %p517 = pneg %p516
      $region50: #{tpu_custom_call.1} parent=5 // pred_check_branch
        %519 = sbr.rel (%p517) target = $region52
      $region51: #{tpu_custom_call.1} parent=5 // pred_region
        %s520 = ssub.s32 %s13, 2
        // Predicated region
        $region53: #{tpu_custom_call.1} parent=51 // pred_check
          %p521 = pneg %p110
        $region54: #{tpu_custom_call.1} parent=51 // pred_check_branch
          %523 = sbr.rel (%p521) target = $region56
        $region55: #{tpu_custom_call.1} parent=51 // pred_region
          %p524 = scmp.lt.s32.totalorder %s19, 1
          %s525 = scalar_select %p524, %s19, 1
          %s526 = smul.addr %s525, 2
          %s527 = smul.addr %s526, 8
          %s528 = scalar_lea.vmem %s3, %s527
        $region56: #{tpu_custom_call.1} parent=51 // pred_fallthru
          _
      $region52: #{tpu_custom_call.1} parent=5 // pred_fallthru
        _
    $region6: #{tpu_custom_call.1} parent=1 // loop_footer
      %s17 = sadd.s32 1, %s13
    $region7: #{tpu_custom_call.1} parent=1 // loop_footer_branch
      %12 = sbr.rel target = $region3
    $region8: #{tpu_custom_call.1} parent=1 // loop_exit
      _
    %529 = vsyncpa [#allocation3], 1
    %s530 = scalar_lea.sflag [#allocation3], 1
    %531 = vsyncpa %s530, 1
    %532 = vsyncpa [#allocation5], 1

</llo_original>
